<compile_context>
chip_gen: v7x
topology: tpu7x:2x2x1
jax: 0.10.0
libtpu: 0.0.40
codegen_flags: <defaults>
</compile_context>

<pallas_src>
import jax
import jax.numpy as jnp
from jax.experimental import pallas as pl
from jax.experimental.pallas import tpu as pltpu


def _locked_dropout_kernel(mask_ref, x_ref, o_ref):
    # mask_ref: (1, tile_n) in x.dtype — identical for every seq tile
    # ("locked" dropout). Broadcasts over the (t_rows, tile_n) x tile:
    # load -> vmul -> store; purely HBM-bandwidth bound.
    o_ref[...] = x_ref[...] * mask_ref[...]


def _pick_tiles(T, Np, itemsize, target_bytes=6 * 1024 * 1024):
    """Pick (t_rows, tile_n) so each x/out buffer is ~target_bytes.

    Prefers a full-width lane tile (tile_n = Np); only tiles the lane axis
    (in multiples of 128) when N is too wide for even a minimal row block.
    Guarantees >= 2 total grid steps when the shape allows it (v7x megacore).
    """
    sub = 8 if itemsize >= 4 else (16 if itemsize == 2 else 32)

    rows = target_bytes // max(1, Np * itemsize)
    if rows >= sub:
        tile_n = Np
        t_rows = min(T, max(sub, (rows // sub) * sub))
    else:
        # N too wide for a full-width row block: tile the lane axis too.
        t_rows = min(T, sub)
        tile_n = max(128, ((target_bytes // (t_rows * itemsize)) // 128) * 128)
        tile_n = min(tile_n, Np)

    # Ensure at least two grid steps so the "parallel" axes can actually be
    # split across v7x's two TensorCores (no-op on v5e/v6e).
    grid_steps = ((T + t_rows - 1) // t_rows) * ((Np + tile_n - 1) // tile_n)
    if grid_steps < 2:
        if T >= 2 * sub:
            t_rows = max(sub, ((t_rows // 2) // sub) * sub)
        elif Np >= 256:
            tile_n = max(128, ((tile_n // 2) // 128) * 128)
    return t_rows, tile_n


def locked_dropout(x, seed: int, dropout: float = 0.5, training: bool = True,
                   block_rows: int | None = None, block_cols: int | None = None):
    """Pallas implementation of LockedDropout.forward.  x: (T, B, H)."""
    if (not training) or (dropout == 0.0):
        return x
    if not (0.0 < dropout < 1.0):
        # PyTorch's bernoulli_ rejects p outside [0, 1]; guard inf/NaN scaling.
        raise ValueError(f"dropout must be in [0, 1), got {dropout}")

    keep_prob = 1.0 - float(dropout)
    inv_keep = 1.0 / keep_prob

    T, B, H = x.shape
    N = B * H
    x2 = x.reshape(T, N)

    # Pad the lane axis to a multiple of 128 -> full-width (unmasked) vst.
    Np = ((N + 127) // 128) * 128
    if Np != N:
        x2 = jnp.pad(x2, ((0, 0), (0, Np - N)))

    # One Bernoulli draw per (b, h) position, shared across the seq axis.
    # Mask built in x.dtype (matches PyTorch, which builds m in x.dtype).
    key = jax.random.PRNGKey(seed)
    keep = jax.random.bernoulli(key, keep_prob, (1, N))
    mask = jnp.where(keep,
                     jnp.asarray(inv_keep, dtype=x.dtype),
                     jnp.asarray(0.0, dtype=x.dtype))
    if Np != N:
        mask = jnp.pad(mask, ((0, 0), (0, Np - N)))

    itemsize = jnp.dtype(x.dtype).itemsize
    t_rows, tile_n = _pick_tiles(T, Np, itemsize)
    if block_rows is not None:
        t_rows = min(block_rows, T)
    if block_cols is not None:
        tile_n = min(block_cols, Np)

    grid_n = pl.cdiv(Np, tile_n)
    grid_t = pl.cdiv(T, t_rows)
    # N (mask-changing) axis outermost, T innermost: the mask block index is
    # constant across the whole inner seq sweep, so it is not re-fetched.
    grid = (grid_n, grid_t)

    out2 = pl.pallas_call(
        _locked_dropout_kernel,
        out_shape=jax.ShapeDtypeStruct((T, Np), x.dtype),
        grid=grid,
        in_specs=[
            pl.BlockSpec((1, tile_n), lambda j, i: (0, j)),       # locked mask
            pl.BlockSpec((t_rows, tile_n), lambda j, i: (i, j)),  # x tile
        ],
        out_specs=pl.BlockSpec((t_rows, tile_n), lambda j, i: (i, j)),
        # Let callers donate x (same shape/dtype as out); XLA copies if not donated.
        input_output_aliases={1: 0},
        compiler_params=pltpu.CompilerParams(
            dimension_semantics=("parallel", "parallel"),  # both axes independent
            vmem_limit_bytes=48 * 1024 * 1024,             # headroom under v7x 64 MiB
        ),
    )(mask, x2)

    if Np != N:
        out2 = out2[:, :N]
    return out2.reshape(T, B, H)


def _check_locked(out, x, keep_scale):
    T = x.shape[0]
    out2 = out.reshape(T, -1)
    x2 = x.reshape(T, -1)
    dropped = jnp.all(out2 == 0.0, axis=0)
    kept = jnp.all(jnp.abs(out2 - keep_scale * x2) < 1e-5, axis=0)
    assert bool(jnp.all(dropped | kept)), "mask not locked across seq axis / bad values"
    assert bool(jnp.any(dropped)) and bool(jnp.any(kept)), "degenerate mask"


if __name__ == "__main__":
    key = jax.random.PRNGKey(0)

    # --- aligned case: exercises both grid axes (grid = (2, 4)) -------------
    T, B, H = 32, 4, 64                        # N = 256 lanes
    x = jax.random.normal(key, (T, B, H), dtype=jnp.float32)
    out = locked_dropout(x, seed=0, dropout=0.5, training=True,
                         block_rows=8, block_cols=128)
    out = jax.block_until_ready(out)
    assert out.shape == x.shape and out.dtype == x.dtype
    _check_locked(out, x, keep_scale=2.0)      # 1 / (1 - 0.5) = 2

    # --- unaligned lane case: N = 120 -> padded to 128, default tiling ------
    key2 = jax.random.PRNGKey(1)
    xb = jax.random.normal(key2, (16, 2, 60), dtype=jnp.float32)
    outb = jax.block_until_ready(locked_dropout(xb, seed=3, dropout=0.5))
    assert outb.shape == xb.shape and outb.dtype == xb.dtype
    _check_locked(outb, xb, keep_scale=2.0)

    # Eval mode / dropout == 0 pass through untouched (PyTorch semantics).
    assert locked_dropout(x, seed=0, dropout=0.5, training=False) is x
    assert locked_dropout(x, seed=0, dropout=0.0, training=True) is x

    print("KERNEL_OK")
</pallas_src>

<mosaic_0001>
module attributes {stable_mosaic.version = 11 : i64} {
  func.func @_locked_dropout_kernel(%arg0: i32, %arg1: i32, %arg2: memref<1x128xf32, #tpu.memory_space<vmem>>, %arg3: memref<8x128xf32, #tpu.memory_space<vmem>>, %arg4: memref<8x128xf32, #tpu.memory_space<vmem>>) attributes {dimension_semantics = [#tpu.dimension_semantics<parallel>, #tpu.dimension_semantics<parallel>], iteration_bounds = array<i64: 2, 4>, scalar_prefetch = 0 : i64, scratch_operands = 0 : i64, tpu.core_type = #tpu.core_type<tc>, window_params = [{transform_indices = @transform_0, window_bounds = array<i64: 1, 128>}, {transform_indices = @transform_1, window_bounds = array<i64: 8, 128>}, {transform_indices = @transform_2, window_bounds = array<i64: 8, 128>}]} {
    %c0 = arith.constant 0 : index
    %c0_0 = arith.constant 0 : index
    %0 = vector.load %arg3[%c0, %c0_0] : memref<8x128xf32, #tpu.memory_space<vmem>>, vector<8x128xf32>
    %c0_1 = arith.constant 0 : index
    %c0_2 = arith.constant 0 : index
    %1 = vector.load %arg2[%c0_1, %c0_2] : memref<1x128xf32, #tpu.memory_space<vmem>>, vector<1x128xf32>
    %2 = vector.broadcast %1 : vector<1x128xf32> to vector<8x128xf32>
    %3 = arith.mulf %0, %2 : vector<8x128xf32>
    %c0_3 = arith.constant 0 : index
    %c0_4 = arith.constant 0 : index
    %4 = vector.load %arg4[%c0_3, %c0_4] : memref<8x128xf32, #tpu.memory_space<vmem>>, vector<8x128xf32>
    tpu.vector_store %arg4[%c0_3, %c0_4], %3 {strides = array<i32>} : memref<8x128xf32, #tpu.memory_space<vmem>>, vector<8x128xf32>,
    return
  }
  func.func @transform_0(%arg0: i32, %arg1: i32) -> (i32, i32) {
    %c0_i32 = arith.constant 0 : i32
    %c0_i32_0 = arith.constant 0 : i32
    return %c0_i32, %arg0 : i32, i32
  }
  func.func @transform_1(%arg0: i32, %arg1: i32) -> (i32, i32) {
    %c0_i32 = arith.constant 0 : i32
    return %arg1, %arg0 : i32, i32
  }
  func.func @transform_2(%arg0: i32, %arg1: i32) -> (i32, i32) {
    %c0_i32 = arith.constant 0 : i32
    return %arg1, %arg0 : i32, i32
  }
}

</mosaic_0001>

<llo_original>
// kernel: tpu_custom_call.1
$region0: #{tpu_custom_call.1}
  #allocation0 [shape = 'u32[]', space=smem, size = 0x4, offset = 0x4, fixed_abs, tag = 'smem constant byte address 0x4 - core index']
  #allocation1 [shape = 'u32[144,128]{1,0:T(1,128)}', space=vmem, size = 0x12000, scoped, tag = 'internal scratch']
  %s0 = inlined_call_operand.vmem [shape: f32[1,256], index: 0, kind: input, shape index: {}]
  %s1 = inlined_call_operand.hbm [shape: f32[32,256], index: 1, kind: input, shape index: {}, may-alias: {1,2}]
  %s2 = inlined_call_operand.hbm [shape: f32[32,256], index: 2, kind: output, shape index: {}, may-alias: {1,2}]
  %s3 = sld [smem:[#allocation0]]
  $region45: #{tpu_custom_call.1} parent=0
    _
  %s5 = ssub.s32 1, %s3
  %s6 = scalar_select 0, %s5, %s3
  $region1: #{tpu_custom_call.1} parent=0
    #allocation2 [shape = 'u8[8192]{0}', space=vmem, size = 0x2000, scoped, tag = 'input window, operand 1']
    #allocation3 [shape = 's32[2]{0}', space=sflag, size = 0x8, scoped, tag = 'scoped memory for tpu_custom_call.1']
    #allocation4 [shape = 's32[2]{0}', space=sflag, size = 0x8, scoped, tag = 'scoped memory for tpu_custom_call.1']
    #allocation5 [shape = 'u8[8192]{0}', space=vmem, size = 0x2000, scoped, tag = 'output window, operand 0']
    %7 = vsyncpa [#allocation3], 0
    %s8 = scalar_lea.sflag [#allocation3], 1
    %9 = vsyncpa %s8, 0
    %10 = vsyncpa [#allocation4], 0
    %s11 = scalar_lea.sflag [#allocation4], 1
    %12 = vsyncpa %s11, 0
    loop: start=0, step=1, limit=10
    $region2: #{tpu_custom_call.1} parent=1 // loop_pre_header
      _
    $region3: #{tpu_custom_call.1} parent=1 // loop_header
      %s14 = sphi 0, %s18
      %p15 = scmp.ge.s32.totalorder %s14, 10
      %s21 = sphi 0, %s33
      %s22 = sphi 0, %s29
      %s23 = sphi 0, %s21
      %s24 = sphi 0, %s22
      %s25 = sphi 0, %s23
      %s26 = sphi 0, %s24
      %s36 = sphi 0, %s38
      %s39 = sphi 0, %s36
      %s40 = sphi 0, %s39
      %s56 = sphi 0, %s40
      %s64 = sphi 0, %s66
      %s67 = sphi 0, %s64
      %s68 = sphi 0, %s67
      %s84 = sphi 0, %s68
      %s92 = sphi 0, %s94
      %s95 = sphi 0, %s92
      %s96 = sphi 0, %s95
      %s112 = sphi 0, %s96
    $region4: #{tpu_custom_call.1} parent=1 // loop_header_branch
      %17 = sbr.rel (%p15) target = $region8
    $region5: #{tpu_custom_call.1} parent=1 // loop_body
      %s19 = ssub.s32 %s14, 1
      %s20 = ssub.s32 %s14, 2
      %s27 = sadd.s32 1, %s22
      %p28 = scmp.ge.s32.totalorder %s27, 4
      %s29 = scalar_select %p28, 0, %s27
      %s30 = sadd.s32 1, %s21
      %s31 = scalar_select %p28, %s30, %s21
      %p32 = scmp.ge.s32.totalorder %s31, 2
      %s33 = scalar_select %p32, 0, %s31
      %s34 = ssub.s32 %s21, %s33
      %p35 = scmp.eq.s32.totalorder %s34, 0
      %s37 = sadd.s32 %s36, 1
      %s38 = scalar_select %p35, %s36, %s37
      %p41 = pneg %p35
      %p42 = scmp.eq.s32.totalorder %s14, 7
      %p43 = por %p41, %p42
      %p44 = scmp.ne.s32.totalorder %s36, %s39
      %p45 = scmp.eq.s32.totalorder %s14, 0
      %p46 = por %p44, %p45
      %p47 = scmp.ne.s32.totalorder %s36, %s39
      %p48 = scmp.eq.s32.totalorder %s19, 7
      %p49 = por %p47, %p48
      %p50 = scmp.ne.s32.totalorder %s39, %s40
      %p51 = scmp.eq.s32.totalorder %s19, 0
      %p52 = por %p50, %p51
      %p53 = scmp.ne.s32.totalorder %s39, %s40
      %p54 = scmp.eq.s32.totalorder %s20, 7
      %p55 = por %p53, %p54
      %p57 = scmp.ne.s32.totalorder %s40, %s56
      %p58 = scmp.eq.s32.totalorder %s20, 0
      %p59 = por %p57, %p58
      %s60 = ssub.s32 %s22, %s29
      %s61 = ssub.s32 %s21, %s33
      %s62 = sor.u32 %s60, %s61
      %p63 = scmp.eq.s32.totalorder %s62, 0
      %s65 = sadd.s32 %s64, 1
      %s66 = scalar_select %p63, %s64, %s65
      %p69 = pneg %p63
      %p70 = scmp.eq.s32.totalorder %s14, 7
      %p71 = por %p69, %p70
      %p72 = scmp.ne.s32.totalorder %s64, %s67
      %p73 = scmp.eq.s32.totalorder %s14, 0
      %p74 = por %p72, %p73
      %p75 = scmp.ne.s32.totalorder %s64, %s67
      %p76 = scmp.eq.s32.totalorder %s19, 7
      %p77 = por %p75, %p76
      %p78 = scmp.ne.s32.totalorder %s67, %s68
      %p79 = scmp.eq.s32.totalorder %s19, 0
      %p80 = por %p78, %p79
      %p81 = scmp.ne.s32.totalorder %s67, %s68
      %p82 = scmp.eq.s32.totalorder %s20, 7
      %p83 = por %p81, %p82
      %p85 = scmp.ne.s32.totalorder %s68, %s84
      %p86 = scmp.eq.s32.totalorder %s20, 0
      %p87 = por %p85, %p86
      %s88 = ssub.s32 %s22, %s29
      %s89 = ssub.s32 %s21, %s33
      %s90 = sor.u32 %s88, %s89
      %p91 = scmp.eq.s32.totalorder %s90, 0
      %s93 = sadd.s32 %s92, 1
      %s94 = scalar_select %p91, %s92, %s93
      %p97 = pneg %p91
      %p98 = scmp.eq.s32.totalorder %s14, 7
      %p99 = por %p97, %p98
      %p100 = scmp.ne.s32.totalorder %s92, %s95
      %p101 = scmp.eq.s32.totalorder %s14, 0
      %p102 = por %p100, %p101
      %p103 = scmp.ne.s32.totalorder %s92, %s95
      %p104 = scmp.eq.s32.totalorder %s19, 7
      %p105 = por %p103, %p104
      %p106 = scmp.ne.s32.totalorder %s95, %s96
      %p107 = scmp.eq.s32.totalorder %s19, 0
      %p108 = por %p106, %p107
      %p109 = scmp.ne.s32.totalorder %s95, %s96
      %p110 = scmp.eq.s32.totalorder %s20, 7
      %p111 = por %p109, %p110
      %p113 = scmp.ne.s32.totalorder %s96, %s112
      %p114 = scmp.eq.s32.totalorder %s20, 0
      %p115 = por %p113, %p114
      %p116 = scmp.le.s32.totalorder 1, %s14
      %p117 = scmp.lt.s32.totalorder %s14, 9
      %p118 = pnand %p116, %p117
      %p119 = pneg %p118
      // Predicated region
      $region9: #{tpu_custom_call.1} parent=5 // pred_check
        _
      $region10: #{tpu_custom_call.1} parent=5 // pred_check_branch
        %121 = sbr.rel (%p118) target = $region12
      $region11: #{tpu_custom_call.1} parent=5 // pred_region
        %s122 = ssub.s32 %s14, 1
      $region12: #{tpu_custom_call.1} parent=5 // pred_fallthru
        _
      %p123 = scmp.lt.s32.totalorder %s14, 8
      // Predicated region
      $region13: #{tpu_custom_call.1} parent=5 // pred_check
        %p124 = pneg %p123
      $region14: #{tpu_custom_call.1} parent=5 // pred_check_branch
        %126 = sbr.rel (%p124) target = $region16
      $region15: #{tpu_custom_call.1} parent=5 // pred_region
        // Predicated region
        $region17: #{tpu_custom_call.1} parent=15 // pred_check
          %p127 = pneg %p46
        $region18: #{tpu_custom_call.1} parent=15 // pred_check_branch
          %129 = sbr.rel (%p127) target = $region20
        $region19: #{tpu_custom_call.1} parent=15 // pred_region
          %p130 = scmp.lt.s32.totalorder %s21, 1
          %s131 = scalar_select %p130, %s21, 1
          %s132 = scalar_lea.vmem %s0, %s131
        $region20: #{tpu_custom_call.1} parent=15 // pred_fallthru
          _
        // Predicated region
        $region21: #{tpu_custom_call.1} parent=15 // pred_check
          %p133 = pneg %p74
        $region22: #{tpu_custom_call.1} parent=15 // pred_check_branch
          %135 = sbr.rel (%p133) target = $region24
        $region23: #{tpu_custom_call.1} parent=15 // pred_region
          %s136 = sand.u32 %s64, 1
          %s137 = scalar_lea.sflag [#allocation3], %s136
          %s138 = sand.u32 %s64, 1
          %s139 = smul.addr %s138, 8
          %s140 = scalar_lea.vmem [#allocation2], %s139
          %s142 = ssub.s32 128, 128
          %143 = vsyncadd %s137, %s142
          %s144 = smul.addr %s22, 2
          %s145 = sadd.s32 %s21, %s144
          %s146 = smul.addr %s145, 128
          %s147 = scalar_lea.hbm %s1, %s146
          %s149 = sshll.u32 %s140, 4
          %s150 = int_to_ptr.vmem [resolvable:$true] %s149
          %152 = dma.hbm_to_vmem [thread:$0]  %s147, 128, %s150, %s137
        $region24: #{tpu_custom_call.1} parent=15 // pred_fallthru
          _
      $region16: #{tpu_custom_call.1} parent=5 // pred_fallthru
        _
      %p153 = scmp.le.s32.totalorder 1, %s14
      %p154 = scmp.lt.s32.totalorder %s14, 9
      %p155 = pnand %p153, %p154
      %p156 = pneg %p155
      // Predicated region
      $region25: #{tpu_custom_call.1} parent=5 // pred_check
        _
      $region26: #{tpu_custom_call.1} parent=5 // pred_check_branch
        %158 = sbr.rel (%p155) target = $region28
      $region27: #{tpu_custom_call.1} parent=5 // pred_region
        %s159 = ssub.s32 %s14, 1
        %s160 = sand.u32 %s67, 1
        %s161 = scalar_lea.sflag [#allocation3], %s160
        %s162 = sand.u32 %s67, 1
        %s163 = smul.addr %s162, 8
        %s164 = scalar_lea.vmem [#allocation2], %s163
        // Predicated region
        $region29: #{tpu_custom_call.1} parent=27 // pred_check
          %p165 = pneg %p80
        $region30: #{tpu_custom_call.1} parent=27 // pred_check_branch
          %167 = sbr.rel (%p165) target = $region32
        $region31: #{tpu_custom_call.1} parent=27 // pred_region
          %168 = dma.done %s161, 128
        $region32: #{tpu_custom_call.1} parent=27 // pred_fallthru
          _
        %p169 = scmp.lt.s32.totalorder %s23, 1
        %s170 = scalar_select %p169, %s23, 1
        %s171 = scalar_lea.vmem %s0, %s170
        %p172 = pneg %p52
        %p173 = pneg %p49
        %s174 = sand.u32 %s67, 1
        %s175 = scalar_lea.sflag [#allocation3], %s174
        %s176 = sand.u32 %s67, 1
        %s177 = smul.addr %s176, 8
        %s178 = scalar_lea.vmem [#allocation2], %s177
        %p179 = pneg %p80
        %p180 = pneg %p77
        %p181 = pneg %p108
        %p182 = pneg %p105
        %s183 = sand.u32 %s95, 1
        %s184 = scalar_lea.sflag [#allocation4], %s183
        %s185 = sand.u32 %s95, 1
        %s186 = smul.addr %s185, 8
        %s187 = scalar_lea.vmem [#allocation5], %s186
        %p188 = scmp.lt.s32.totalorder %s23, 1
        %s189 = scalar_select %p188, %s23, 1
        %s190 = scalar_lea.vmem %s0, %s189
        %v191 = vld [vmem:[%s164] sm:$0xff]
        %v192 = vld [vmem:[%s190] sm:$0x1]
        %v194 = vlaneseq
        %v195 = vshrl.u32 %v194, 7
        %v196 = vsub.s32 0, %v195
        %v197 = vrot.slane %v192, %v196
        %v199 = vmul.f32 %v191, %v197
        %200 = vst [vmem:[%s187] sm:$0xff] %v199
        %s201 = sand.u32 %s95, 1
        %s202 = scalar_lea.sflag [#allocation4], %s201
        %s203 = sand.u32 %s95, 1
        %s204 = smul.addr %s203, 8
        %s205 = scalar_lea.vmem [#allocation5], %s204
        // Predicated region
        $region33: #{tpu_custom_call.1} parent=27 // pred_check
          %p206 = pneg %p105
        $region34: #{tpu_custom_call.1} parent=27 // pred_check_branch
          %208 = sbr.rel (%p206) target = $region36
        $region35: #{tpu_custom_call.1} parent=27 // pred_region
          %s210 = ssub.s32 128, 128
          %211 = vsyncadd %s202, %s210
          %s212 = smul.addr %s24, 2
          %s213 = sadd.s32 %s23, %s212
          %s214 = smul.addr %s213, 128
          %s215 = scalar_lea.hbm %s2, %s214
          %s217 = sshll.u32 %s205, 4
          %s218 = int_to_ptr.vmem [resolvable:$true] %s217
          %220 = dma.vmem_to_hbm [thread:$0]  %s218, 128, %s215, %s202
        $region36: #{tpu_custom_call.1} parent=27 // pred_fallthru
          _
      $region28: #{tpu_custom_call.1} parent=5 // pred_fallthru
        _
      %p221 = scmp.le.s32.totalorder 2, %s14
      // Predicated region
      $region37: #{tpu_custom_call.1} parent=5 // pred_check
        %p222 = pneg %p221
      $region38: #{tpu_custom_call.1} parent=5 // pred_check_branch
        %224 = sbr.rel (%p222) target = $region40
      $region39: #{tpu_custom_call.1} parent=5 // pred_region
        %s225 = ssub.s32 %s14, 2
        // Predicated region
        $region41: #{tpu_custom_call.1} parent=39 // pred_check
          %p226 = pneg %p111
        $region42: #{tpu_custom_call.1} parent=39 // pred_check_branch
          %228 = sbr.rel (%p226) target = $region44
        $region43: #{tpu_custom_call.1} parent=39 // pred_region
          %s229 = sand.u32 %s96, 1
          %s230 = scalar_lea.sflag [#allocation4], %s229
          %s231 = sand.u32 %s96, 1
          %s232 = smul.addr %s231, 8
          %s233 = scalar_lea.vmem [#allocation5], %s232
          %234 = dma.done %s230, 128
        $region44: #{tpu_custom_call.1} parent=39 // pred_fallthru
          _
      $region40: #{tpu_custom_call.1} parent=5 // pred_fallthru
        _
    $region6: #{tpu_custom_call.1} parent=1 // loop_footer
      %s18 = sadd.s32 1, %s14
    $region7: #{tpu_custom_call.1} parent=1 // loop_footer_branch
      %13 = sbr.rel target = $region3
    $region8: #{tpu_custom_call.1} parent=1 // loop_exit
      _
    %235 = vsyncpa [#allocation3], 1
    %s236 = scalar_lea.sflag [#allocation3], 1
    %237 = vsyncpa %s236, 1
    %238 = vsyncpa [#allocation4], 1
    %s239 = scalar_lea.sflag [#allocation4], 1
    %240 = vsyncpa %s239, 1

</llo_original>
